<compile_context>
chip_gen: v7x
topology: tpu7x:2x2x1
jax: 0.10.0
libtpu: 0.0.40
codegen_flags: <defaults>
</compile_context>

<pallas_src>
import jax
import jax.numpy as jnp
from jax.experimental import pallas as pl
from jax.experimental.pallas import tpu as pltpu


def _gnn_kernel(src_ref, dst_ref, x_ref, w1_ref, b1_ref, w2_ref, b2_ref, out_ref):
    n = x_ref.shape[0]
    e = dst_ref.shape[1]

    # ---- fused adjacency build (replaces XLA scatter) ----
    # A[i, j] = #edges j -> i  =  sum_e (dst_e == i) * (src_e == j)
    dst = dst_ref[...]                                      # [1, E] int32 (pad = -1)
    src = src_ref[...]                                      # [E, 1] int32 (pad = -1)
    oh_dst = (jax.lax.broadcasted_iota(jnp.int32, (n, e), 0) == dst).astype(jnp.bfloat16)
    oh_src = (jax.lax.broadcasted_iota(jnp.int32, (e, n), 1) == src).astype(jnp.bfloat16)
    counts = jnp.dot(oh_dst, oh_src, preferred_element_type=jnp.float32)   # [N, N] exact
    deg = counts.sum(axis=1, keepdims=True)                                # [N, 1] f32
    inv_deg = 1.0 / jnp.maximum(deg, 1.0)                                  # zero-deg rows -> 0 aggr
    adj = counts.astype(jnp.bfloat16)                                      # small ints, exact in bf16

    xb = x_ref[...]                                          # [N, H] bf16

    # ---- layer 1: SAGEConv + ReLU (single fused K=2H weight matmul) ----
    aggr1 = jnp.dot(adj, xb, preferred_element_type=jnp.float32) * inv_deg   # mean_{j in N(i)} x_j
    cat1 = jnp.concatenate([aggr1.astype(jnp.bfloat16), xb], axis=-1)        # [N, 2H]
    h = jnp.dot(cat1, w1_ref[...], preferred_element_type=jnp.float32) + b1_ref[...]
    h = jnp.maximum(h, 0.0)                                                  # ReLU
    hb = h.astype(jnp.bfloat16)

    # ---- layer 2: SAGEConv ----
    aggr2 = jnp.dot(adj, hb, preferred_element_type=jnp.float32) * inv_deg
    cat2 = jnp.concatenate([aggr2.astype(jnp.bfloat16), hb], axis=-1)
    out = jnp.dot(cat2, w2_ref[...], preferred_element_type=jnp.float32) + b2_ref[...]

    out_ref[...] = out.astype(out_ref.dtype)


def prepare_params(params):
    """One-time weight prep (outside the per-call hot path).

    PyTorch-convention [out, in] weights are transposed and the lin_l / lin_r
    weights of each layer are stacked along K so the kernel does one matmul:
        concat([aggr, x], -1) @ [[W_l^T], [W_r^T]]  ==  aggr @ W_l^T + x @ W_r^T
    """
    h = params["b1"].shape[0]
    w1 = jnp.concatenate([params["w1l"].T, params["w1r"].T], axis=0).astype(jnp.bfloat16)  # [2H, H]
    w2 = jnp.concatenate([params["w2l"].T, params["w2r"].T], axis=0).astype(jnp.bfloat16)  # [2H, H]
    b1 = params["b1"].reshape(1, h).astype(jnp.float32)
    b2 = params["b2"].reshape(1, h).astype(jnp.float32)
    return {"w1": w1, "b1": b1, "w2": w2, "b2": b2}


def _prepare_edges(edge_index):
    """Pad edge lists to a lane-friendly length (pad value -1 matches no node)."""
    e = edge_index.shape[1]
    e_pad = ((e + 127) // 128) * 128
    e_pad = max(e_pad, 128)
    pad = e_pad - e
    src = jnp.pad(edge_index[0].astype(jnp.int32), (0, pad), constant_values=-1)
    dst = jnp.pad(edge_index[1].astype(jnp.int32), (0, pad), constant_values=-1)
    return src.reshape(e_pad, 1), dst.reshape(1, e_pad)


def gnn_forward(x, edge_index, prepped):
    """x: [N, H] float32 node features; edge_index: [2, E] int32 (src, dst)."""
    n, hdim = x.shape
    src_col, dst_row = _prepare_edges(edge_index)
    xb = x.astype(jnp.bfloat16)          # bf16 MXU operands (f32 accumulation in-kernel)

    vmem = pl.BlockSpec(memory_space=pltpu.MemorySpace.VMEM)
    return pl.pallas_call(
        _gnn_kernel,
        out_shape=jax.ShapeDtypeStruct((n, hdim), jnp.float32),
        in_specs=[vmem] * 7,
        out_specs=vmem,
    )(src_col, dst_row, xb, prepped["w1"], prepped["b1"], prepped["w2"], prepped["b2"])


def _reference(x, edge_index, params):
    """Pure-JAX f32 reference for sanity checking."""
    n, _ = x.shape
    src, dst = edge_index[0], edge_index[1]
    adj = jnp.zeros((n, n), jnp.float32).at[dst, src].add(1.0)
    adj = adj / jnp.maximum(adj.sum(axis=1, keepdims=True), 1.0)

    def sage(a, xx, wl, wr, b):
        return (a @ xx) @ wl.T + xx @ wr.T + b

    h1 = jax.nn.relu(sage(adj, x, params["w1l"], params["w1r"], params["b1"]))
    return sage(adj, h1, params["w2l"], params["w2r"], params["b2"])


if __name__ == "__main__":
    N = 64           # number of nodes
    H = 32           # hidden_channels
    E = 256          # number of edges

    key = jax.random.PRNGKey(0)
    kx, ke1, ke2, k1, k2, k3, k4, k5, k6 = jax.random.split(key, 9)

    x = jax.random.normal(kx, (N, H), dtype=jnp.float32)
    edge_index = jnp.stack([
        jax.random.randint(ke1, (E,), 0, N, dtype=jnp.int32),
        jax.random.randint(ke2, (E,), 0, N, dtype=jnp.int32),
    ], axis=0)

    scale = 1.0 / jnp.sqrt(H)
    params = {
        "w1l": jax.random.uniform(k1, (H, H), jnp.float32, -scale, scale),
        "w1r": jax.random.uniform(k2, (H, H), jnp.float32, -scale, scale),
        "b1":  jax.random.uniform(k3, (H,),   jnp.float32, -scale, scale),
        "w2l": jax.random.uniform(k4, (H, H), jnp.float32, -scale, scale),
        "w2r": jax.random.uniform(k5, (H, H), jnp.float32, -scale, scale),
        "b2":  jax.random.uniform(k6, (H,),   jnp.float32, -scale, scale),
    }

    prepped = prepare_params(params)            # one-time weight stacking / transpose
    out = jax.block_until_ready(gnn_forward(x, edge_index, prepped))
    ref = jax.block_until_ready(_reference(x, edge_index, params))

    assert out.shape == (N, H)
    # bf16 MXU operands with f32 accumulation -> loosened tolerance.
    assert jnp.allclose(out, ref, atol=5e-2, rtol=5e-2), float(jnp.max(jnp.abs(out - ref)))
    print("KERNEL_OK")
</pallas_src>

<mosaic_0001>
module attributes {stable_mosaic.version = 11 : i64} {
  func.func @_gnn_kernel(%arg0: memref<256x1xi32, #tpu.memory_space<vmem>>, %arg1: memref<1x256xi32, #tpu.memory_space<vmem>>, %arg2: memref<64x32xbf16, #tpu.memory_space<vmem>>, %arg3: memref<64x32xbf16, #tpu.memory_space<vmem>>, %arg4: memref<1x32xf32, #tpu.memory_space<vmem>>, %arg5: memref<64x32xbf16, #tpu.memory_space<vmem>>, %arg6: memref<1x32xf32, #tpu.memory_space<vmem>>, %arg7: memref<64x32xf32, #tpu.memory_space<vmem>>) attributes {dimension_semantics = [], scalar_prefetch = 0 : i64, scratch_operands = 0 : i64, tpu.core_type = #tpu.core_type<tc>} {
    %c0 = arith.constant 0 : index
    %c0_0 = arith.constant 0 : index
    %0 = vector.load %arg1[%c0, %c0_0] : memref<1x256xi32, #tpu.memory_space<vmem>>, vector<1x256xi32>
    %c0_1 = arith.constant 0 : index
    %c0_2 = arith.constant 0 : index
    %1 = vector.load %arg0[%c0_1, %c0_2] : memref<256x1xi32, #tpu.memory_space<vmem>>, vector<256x1xi32>
    %2 = tpu.iota {dimensions = array<i32: 0>} : vector<64x256xi32>
    %3 = vector.broadcast %0 : vector<1x256xi32> to vector<64x256xi32>
    %4 = arith.cmpi eq, %2, %3 : vector<64x256xi32>
    %5 = arith.extui %4 : vector<64x256xi1> to vector<64x256xi32>
    %6 = arith.sitofp %5 : vector<64x256xi32> to vector<64x256xf32>
    %7 = arith.truncf %6 : vector<64x256xf32> to vector<64x256xbf16>
    %8 = tpu.iota {dimensions = array<i32: 1>} : vector<256x64xi32>
    %9 = vector.broadcast %1 : vector<256x1xi32> to vector<256x64xi32>
    %10 = arith.cmpi eq, %8, %9 : vector<256x64xi32>
    %11 = arith.extui %10 : vector<256x64xi1> to vector<256x64xi32>
    %12 = arith.sitofp %11 : vector<256x64xi32> to vector<256x64xf32>
    %13 = arith.truncf %12 : vector<256x64xf32> to vector<256x64xbf16>
    %cst = arith.constant dense<0.000000e+00> : vector<64x64xf32>
    %14 = tpu.matmul %7, %13, %cst {dimension_numbers = #tpu.dot_dimension_numbers<[1], [0], [0], [1], [0, 0, 1, 1], [], []>} : vector<64x256xbf16>, vector<256x64xbf16>, vector<64x64xf32> -> vector<64x64xf32>
    %cst_3 = arith.constant dense<0.000000e+00> : vector<64xf32>
    %15 = vector.multi_reduction <add>, %14, %cst_3 [1] : vector<64x64xf32> to vector<64xf32>
    %16 = vector.shape_cast %15 : vector<64xf32> to vector<64x1xf32>
    %cst_4 = arith.constant 1.000000e+00 : f32
    %17 = vector.broadcast %cst_4 : f32 to vector<64x1xf32>
    %18 = arith.maximumf %16, %17 : vector<64x1xf32>
    %cst_5 = arith.constant 1.000000e+00 : f32
    %19 = vector.broadcast %cst_5 : f32 to vector<64x1xf32>
    %20 = arith.divf %19, %18 : vector<64x1xf32>
    %21 = arith.truncf %14 : vector<64x64xf32> to vector<64x64xbf16>
    %c0_6 = arith.constant 0 : index
    %c0_7 = arith.constant 0 : index
    %22 = vector.load %arg2[%c0_6, %c0_7] : memref<64x32xbf16, #tpu.memory_space<vmem>>, vector<64x32xbf16>
    %cst_8 = arith.constant dense<0.000000e+00> : vector<64x32xf32>
    %23 = tpu.matmul %21, %22, %cst_8 {dimension_numbers = #tpu.dot_dimension_numbers<[1], [0], [0], [1], [0, 0, 1, 1], [], []>} : vector<64x64xbf16>, vector<64x32xbf16>, vector<64x32xf32> -> vector<64x32xf32>
    %24 = vector.broadcast %20 : vector<64x1xf32> to vector<64x32xf32>
    %25 = arith.mulf %23, %24 : vector<64x32xf32>
    %26 = arith.truncf %25 : vector<64x32xf32> to vector<64x32xbf16>
    %27 = tpu.concatenate %26, %22 in 1 : vector<64x32xbf16>, vector<64x32xbf16> -> vector<64x64xbf16>
    %c0_9 = arith.constant 0 : index
    %c0_10 = arith.constant 0 : index
    %28 = vector.load %arg3[%c0_9, %c0_10] : memref<64x32xbf16, #tpu.memory_space<vmem>>, vector<64x32xbf16>
    %cst_11 = arith.constant dense<0.000000e+00> : vector<64x32xf32>
    %29 = tpu.matmul %27, %28, %cst_11 {dimension_numbers = #tpu.dot_dimension_numbers<[1], [0], [0], [1], [0, 0, 1, 1], [], []>} : vector<64x64xbf16>, vector<64x32xbf16>, vector<64x32xf32> -> vector<64x32xf32>
    %c0_12 = arith.constant 0 : index
    %c0_13 = arith.constant 0 : index
    %30 = vector.load %arg4[%c0_12, %c0_13] : memref<1x32xf32, #tpu.memory_space<vmem>>, vector<1x32xf32>
    %31 = vector.broadcast %30 : vector<1x32xf32> to vector<64x32xf32>
    %32 = arith.addf %29, %31 : vector<64x32xf32>
    %cst_14 = arith.constant 0.000000e+00 : f32
    %33 = vector.broadcast %cst_14 : f32 to vector<64x32xf32>
    %34 = arith.maximumf %32, %33 : vector<64x32xf32>
    %35 = arith.truncf %34 : vector<64x32xf32> to vector<64x32xbf16>
    %cst_15 = arith.constant dense<0.000000e+00> : vector<64x32xf32>
    %36 = tpu.matmul %21, %35, %cst_15 {dimension_numbers = #tpu.dot_dimension_numbers<[1], [0], [0], [1], [0, 0, 1, 1], [], []>} : vector<64x64xbf16>, vector<64x32xbf16>, vector<64x32xf32> -> vector<64x32xf32>
    %37 = vector.broadcast %20 : vector<64x1xf32> to vector<64x32xf32>
    %38 = arith.mulf %36, %37 : vector<64x32xf32>
    %39 = arith.truncf %38 : vector<64x32xf32> to vector<64x32xbf16>
    %40 = tpu.concatenate %39, %35 in 1 : vector<64x32xbf16>, vector<64x32xbf16> -> vector<64x64xbf16>
    %c0_16 = arith.constant 0 : index
    %c0_17 = arith.constant 0 : index
    %41 = vector.load %arg5[%c0_16, %c0_17] : memref<64x32xbf16, #tpu.memory_space<vmem>>, vector<64x32xbf16>
    %cst_18 = arith.constant dense<0.000000e+00> : vector<64x32xf32>
    %42 = tpu.matmul %40, %41, %cst_18 {dimension_numbers = #tpu.dot_dimension_numbers<[1], [0], [0], [1], [0, 0, 1, 1], [], []>} : vector<64x64xbf16>, vector<64x32xbf16>, vector<64x32xf32> -> vector<64x32xf32>
    %c0_19 = arith.constant 0 : index
    %c0_20 = arith.constant 0 : index
    %43 = vector.load %arg6[%c0_19, %c0_20] : memref<1x32xf32, #tpu.memory_space<vmem>>, vector<1x32xf32>
    %44 = vector.broadcast %43 : vector<1x32xf32> to vector<64x32xf32>
    %45 = arith.addf %42, %44 : vector<64x32xf32>
    %c0_21 = arith.constant 0 : index
    %c0_22 = arith.constant 0 : index
    %46 = vector.load %arg7[%c0_21, %c0_22] : memref<64x32xf32, #tpu.memory_space<vmem>>, vector<64x32xf32>
    tpu.vector_store %arg7[%c0_21, %c0_22], %45 {strides = array<i32>} : memref<64x32xf32, #tpu.memory_space<vmem>>, vector<64x32xf32>,
    return
  }
}

</mosaic_0001>

<llo_original>
// kernel: tpu_custom_call.1
$region0: #{tpu_custom_call.1}
  #allocation0 [shape = 'u32[]', space=smem, size = 0x4, offset = 0x4, fixed_abs, tag = 'smem constant byte address 0x4 - core index']
  #allocation1 [shape = 'u32[144,128]{1,0:T(1,128)}', space=vmem, size = 0x12000, scoped, tag = 'internal scratch']
  %s0 = inlined_call_operand.vmem [shape: s32[256,1], index: 0, kind: input, shape index: {}]
  %s1 = inlined_call_operand.vmem [shape: s32[1,256], index: 1, kind: input, shape index: {}]
  %s2 = inlined_call_operand.vmem [shape: bf16[64,32], index: 2, kind: input, shape index: {}]
  %s3 = inlined_call_operand.vmem [shape: bf16[64,32], index: 3, kind: input, shape index: {}]
  %s4 = inlined_call_operand.vmem [shape: f32[1,32], index: 4, kind: input, shape index: {}]
  %s5 = inlined_call_operand.vmem [shape: bf16[64,32], index: 5, kind: input, shape index: {}]
  %s6 = inlined_call_operand.vmem [shape: f32[1,32], index: 6, kind: input, shape index: {}]
  %s7 = inlined_call_operand.vmem [shape: f32[64,32], index: 7, kind: output, shape index: {}]
  %s8 = sld [smem:[#allocation0]]
  $region38: #{tpu_custom_call.1} parent=0
    _
  %s10 = ssub.s32 1, %s8
  %s11 = scalar_select 0, %s10, %s8
  // Predicated region
  $region2: #{tpu_custom_call.1} parent=0 // pred_check
    _
  $region3: #{tpu_custom_call.1} parent=0 // pred_check_branch
    %13 = sbr.rel (0) target = $region5
  $region4: #{tpu_custom_call.1} parent=0 // pred_region
    _
  $region5: #{tpu_custom_call.1} parent=0 // pred_fallthru
    _
  // Predicated region
  $region6: #{tpu_custom_call.1} parent=0 // pred_check
    _
  $region7: #{tpu_custom_call.1} parent=0 // pred_check_branch
    %15 = sbr.rel (0) target = $region9
  $region8: #{tpu_custom_call.1} parent=0 // pred_region
    _
  $region9: #{tpu_custom_call.1} parent=0 // pred_fallthru
    _
  // Predicated region
  $region10: #{tpu_custom_call.1} parent=0 // pred_check
    _
  $region11: #{tpu_custom_call.1} parent=0 // pred_check_branch
    %17 = sbr.rel (0) target = $region13
  $region12: #{tpu_custom_call.1} parent=0 // pred_region
    _
  $region13: #{tpu_custom_call.1} parent=0 // pred_fallthru
    _
  // Predicated region
  $region14: #{tpu_custom_call.1} parent=0 // pred_check
    _
  $region15: #{tpu_custom_call.1} parent=0 // pred_check_branch
    %19 = sbr.rel (0) target = $region17
  $region16: #{tpu_custom_call.1} parent=0 // pred_region
    _
  $region17: #{tpu_custom_call.1} parent=0 // pred_fallthru
    _
  // Predicated region
  $region18: #{tpu_custom_call.1} parent=0 // pred_check
    _
  $region19: #{tpu_custom_call.1} parent=0 // pred_check_branch
    %21 = sbr.rel (0) target = $region21
  $region20: #{tpu_custom_call.1} parent=0 // pred_region
    _
  $region21: #{tpu_custom_call.1} parent=0 // pred_fallthru
    _
  // Predicated region
  $region22: #{tpu_custom_call.1} parent=0 // pred_check
    _
  $region23: #{tpu_custom_call.1} parent=0 // pred_check_branch
    %23 = sbr.rel (0) target = $region25
  $region24: #{tpu_custom_call.1} parent=0 // pred_region
    _
  $region25: #{tpu_custom_call.1} parent=0 // pred_fallthru
    _
  // Predicated region
  $region26: #{tpu_custom_call.1} parent=0 // pred_check
    _
  $region27: #{tpu_custom_call.1} parent=0 // pred_check_branch
    %25 = sbr.rel (0) target = $region29
  $region28: #{tpu_custom_call.1} parent=0 // pred_region
    _
  $region29: #{tpu_custom_call.1} parent=0 // pred_fallthru
    _
  %v27 = vld [vmem:[%s1] sm:$0x3]
  %v28 = vld [vmem:[%s0] sm:$0xff]
  %v29 = vld [vmem:[%s0 + $0x8] sm:$0xff]
  %v30 = vld [vmem:[%s0 + $0x10] sm:$0xff]
  %v31 = vld [vmem:[%s0 + $0x18] sm:$0xff]
  %v32 = vld [vmem:[%s0 + $0x20] sm:$0xff]
  %v33 = vld [vmem:[%s0 + $0x28] sm:$0xff]
  %v34 = vld [vmem:[%s0 + $0x30] sm:$0xff]
  %v35 = vld [vmem:[%s0 + $0x38] sm:$0xff]
  %v36 = vld [vmem:[%s0 + $0x40] sm:$0xff]
  %v37 = vld [vmem:[%s0 + $0x48] sm:$0xff]
  %v38 = vld [vmem:[%s0 + $0x50] sm:$0xff]
  %v39 = vld [vmem:[%s0 + $0x58] sm:$0xff]
  %v40 = vld [vmem:[%s0 + $0x60] sm:$0xff]
  %v41 = vld [vmem:[%s0 + $0x68] sm:$0xff]
  %v42 = vld [vmem:[%s0 + $0x70] sm:$0xff]
  %v43 = vld [vmem:[%s0 + $0x78] sm:$0xff]
  %v44 = vld [vmem:[%s0 + $0x80] sm:$0xff]
  %v45 = vld [vmem:[%s0 + $0x88] sm:$0xff]
  %v46 = vld [vmem:[%s0 + $0x90] sm:$0xff]
  %v47 = vld [vmem:[%s0 + $0x98] sm:$0xff]
  %v48 = vld [vmem:[%s0 + $0xa0] sm:$0xff]
  %v49 = vld [vmem:[%s0 + $0xa8] sm:$0xff]
  %v50 = vld [vmem:[%s0 + $0xb0] sm:$0xff]
  %v51 = vld [vmem:[%s0 + $0xb8] sm:$0xff]
  %v52 = vld [vmem:[%s0 + $0xc0] sm:$0xff]
  %v53 = vld [vmem:[%s0 + $0xc8] sm:$0xff]
  %v54 = vld [vmem:[%s0 + $0xd0] sm:$0xff]
  %v55 = vld [vmem:[%s0 + $0xd8] sm:$0xff]
  %v56 = vld [vmem:[%s0 + $0xe0] sm:$0xff]
  %v57 = vld [vmem:[%s0 + $0xe8] sm:$0xff]
  %v58 = vld [vmem:[%s0 + $0xf0] sm:$0xff]
  %v59 = vld [vmem:[%s0 + $0xf8] sm:$0xff]
  %v60 = vlaneseq
  %v61 = vshrl.u32 %v60, 7
  %v62 = vadd.s32 %v61, 8
  %v63 = vadd.s32 %v61, 16
  %v64 = vadd.s32 %v61, 24
  %v65 = vadd.s32 %v61, 32
  %v66 = vadd.s32 %v61, 40
  %v67 = vadd.s32 %v61, 48
  %v68 = vadd.s32 %v61, 56
  %v69 = vlaneseq
  %v70 = vshrl.u32 %v69, 7
  %v71 = vsub.s32 0, %v70
  %v72 = vrot.slane %v27, %v71
  %v73 = vlaneseq
  %v74 = vshrl.u32 %v73, 7
  %v75 = vsub.s32 1, %v74
  %v76 = vrot.slane %v27, %v75
  %vm77 = vcmp.eq.s32.totalorder %v61, %v72
  %vm78 = vcmp.eq.s32.totalorder %v61, %v76
  %vm79 = vcmp.eq.s32.totalorder %v62, %v72
  %vm80 = vcmp.eq.s32.totalorder %v62, %v76
  %vm81 = vcmp.eq.s32.totalorder %v63, %v72
  %vm82 = vcmp.eq.s32.totalorder %v63, %v76
  %vm83 = vcmp.eq.s32.totalorder %v64, %v72
  %vm84 = vcmp.eq.s32.totalorder %v64, %v76
  %vm85 = vcmp.eq.s32.totalorder %v65, %v72
  %vm86 = vcmp.eq.s32.totalorder %v65, %v76
  %vm87 = vcmp.eq.s32.totalorder %v66, %v72
  %vm88 = vcmp.eq.s32.totalorder %v66, %v76
  %vm89 = vcmp.eq.s32.totalorder %v67, %v72
  %vm90 = vcmp.eq.s32.totalorder %v67, %v76
  %vm91 = vcmp.eq.s32.totalorder %v68, %v72
  %vm92 = vcmp.eq.s32.totalorder %v68, %v76
  %v93 = vsel %vm77, 1, 0
  %v94 = vsel %vm78, 1, 0
  %v95 = vsel %vm79, 1, 0
  %v96 = vsel %vm80, 1, 0
  %v97 = vsel %vm81, 1, 0
  %v98 = vsel %vm82, 1, 0
  %v99 = vsel %vm83, 1, 0
  %v100 = vsel %vm84, 1, 0
  %v101 = vsel %vm85, 1, 0
  %v102 = vsel %vm86, 1, 0
  %v103 = vsel %vm87, 1, 0
  %v104 = vsel %vm88, 1, 0
  %v105 = vsel %vm89, 1, 0
  %v106 = vsel %vm90, 1, 0
  %v107 = vsel %vm91, 1, 0
  %v108 = vsel %vm92, 1, 0
  %v109 = vcvt.s32.f32 %v93
  %v110 = vcvt.s32.f32 %v94
  %v111 = vcvt.s32.f32 %v95
  %v112 = vcvt.s32.f32 %v96
  %v113 = vcvt.s32.f32 %v97
  %v114 = vcvt.s32.f32 %v98
  %v115 = vcvt.s32.f32 %v99
  %v116 = vcvt.s32.f32 %v100
  %v117 = vcvt.s32.f32 %v101
  %v118 = vcvt.s32.f32 %v102
  %v119 = vcvt.s32.f32 %v103
  %v120 = vcvt.s32.f32 %v104
  %v121 = vcvt.s32.f32 %v105
  %v122 = vcvt.s32.f32 %v106
  %v123 = vcvt.s32.f32 %v107
  %v124 = vcvt.s32.f32 %v108
  %v125 = vpack.c.bf16 %v111, %v109
  %v126 = vpack.c.bf16 %v112, %v110
  %v127 = vpack.c.bf16 %v115, %v113
  %v128 = vpack.c.bf16 %v116, %v114
  %v129 = vpack.c.bf16 %v119, %v117
  %v130 = vpack.c.bf16 %v120, %v118
  %v131 = vpack.c.bf16 %v123, %v121
  %v132 = vpack.c.bf16 %v124, %v122
  %v133 = vlaneseq
  %v134 = vand.u32 %v133, 127
  %135 = vset.pattern.permute.xlu0 0
  %136 = vperm.xlu0 %135, %v28
  %v137 = vpop.permute.xlu0 %136
  %138 = vset.pattern.permute.xlu0 0
  %139 = vperm.xlu0 %138, %v29
  %v140 = vpop.permute.xlu0 %139
  %141 = vset.pattern.permute.xlu0 0
  %142 = vperm.xlu0 %141, %v30
  %v143 = vpop.permute.xlu0 %142
  %144 = vset.pattern.permute.xlu0 0
  %145 = vperm.xlu0 %144, %v31
  %v146 = vpop.permute.xlu0 %145
  %147 = vset.pattern.permute.xlu0 0
  %148 = vperm.xlu0 %147, %v32
  %v149 = vpop.permute.xlu0 %148
  %150 = vset.pattern.permute.xlu0 0
  %151 = vperm.xlu0 %150, %v33
  %v152 = vpop.permute.xlu0 %151
  %153 = vset.pattern.permute.xlu0 0
  %154 = vperm.xlu0 %153, %v34
  %v155 = vpop.permute.xlu0 %154
  %156 = vset.pattern.permute.xlu0 0
  %157 = vperm.xlu0 %156, %v35
  %v158 = vpop.permute.xlu0 %157
  %159 = vset.pattern.permute.xlu0 0
  %160 = vperm.xlu0 %159, %v36
  %v161 = vpop.permute.xlu0 %160
  %162 = vset.pattern.permute.xlu0 0
  %163 = vperm.xlu0 %162, %v37
  %v164 = vpop.permute.xlu0 %163
  %165 = vset.pattern.permute.xlu0 0
  %166 = vperm.xlu0 %165, %v38
  %v167 = vpop.permute.xlu0 %166
  %168 = vset.pattern.permute.xlu0 0
  %169 = vperm.xlu0 %168, %v39
  %v170 = vpop.permute.xlu0 %169
  %171 = vset.pattern.permute.xlu0 0
  %172 = vperm.xlu0 %171, %v40
  %v173 = vpop.permute.xlu0 %172
  %174 = vset.pattern.permute.xlu0 0
  %175 = vperm.xlu0 %174, %v41
  %v176 = vpop.permute.xlu0 %175
  %177 = vset.pattern.permute.xlu0 0
  %178 = vperm.xlu0 %177, %v42
  %v179 = vpop.permute.xlu0 %178
  %180 = vset.pattern.permute.xlu0 0
  %181 = vperm.xlu0 %180, %v43
  %v182 = vpop.permute.xlu0 %181
  %183 = vset.pattern.permute.xlu0 0
  %184 = vperm.xlu0 %183, %v44
  %v185 = vpop.permute.xlu0 %184
  %186 = vset.pattern.permute.xlu0 0
  %187 = vperm.xlu0 %186, %v45
  %v188 = vpop.permute.xlu0 %187
  %189 = vset.pattern.permute.xlu0 0
  %190 = vperm.xlu0 %189, %v46
  %v191 = vpop.permute.xlu0 %190
  %192 = vset.pattern.permute.xlu0 0
  %193 = vperm.xlu0 %192, %v47
  %v194 = vpop.permute.xlu0 %193
  %195 = vset.pattern.permute.xlu0 0
  %196 = vperm.xlu0 %195, %v48
  %v197 = vpop.permute.xlu0 %196
  %198 = vset.pattern.permute.xlu0 0
  %199 = vperm.xlu0 %198, %v49
  %v200 = vpop.permute.xlu0 %199
  %201 = vset.pattern.permute.xlu0 0
  %202 = vperm.xlu0 %201, %v50
  %v203 = vpop.permute.xlu0 %202
  %204 = vset.pattern.permute.xlu0 0
  %205 = vperm.xlu0 %204, %v51
  %v206 = vpop.permute.xlu0 %205
  %207 = vset.pattern.permute.xlu0 0
  %208 = vperm.xlu0 %207, %v52
  %v209 = vpop.permute.xlu0 %208
  %210 = vset.pattern.permute.xlu0 0
  %211 = vperm.xlu0 %210, %v53
  %v212 = vpop.permute.xlu0 %211
  %213 = vset.pattern.permute.xlu0 0
  %214 = vperm.xlu0 %213, %v54
  %v215 = vpop.permute.xlu0 %214
  %216 = vset.pattern.permute.xlu0 0
  %217 = vperm.xlu0 %216, %v55
  %v218 = vpop.permute.xlu0 %217
  %219 = vset.pattern.permute.xlu0 0
  %220 = vperm.xlu0 %219, %v56
  %v221 = vpop.permute.xlu0 %220
  %222 = vset.pattern.permute.xlu0 0
  %223 = vperm.xlu0 %222, %v57
  %v224 = vpop.permute.xlu0 %223
  %225 = vset.pattern.permute.xlu0 0
  %226 = vperm.xlu0 %225, %v58
  %v227 = vpop.permute.xlu0 %226
  %228 = vset.pattern.permute.xlu0 0
  %229 = vperm.xlu0 %228, %v59
  %v230 = vpop.permute.xlu0 %229
  %vm231 = vcmp.eq.s32.totalorder %v134, %v137
  %vm232 = vcmp.eq.s32.totalorder %v134, %v140
  %vm233 = vcmp.eq.s32.totalorder %v134, %v143
  %vm234 = vcmp.eq.s32.totalorder %v134, %v146
  %vm235 = vcmp.eq.s32.totalorder %v134, %v149
  %vm236 = vcmp.eq.s32.totalorder %v134, %v152
  %vm237 = vcmp.eq.s32.totalorder %v134, %v155
  %vm238 = vcmp.eq.s32.totalorder %v134, %v158
  %vm239 = vcmp.eq.s32.totalorder %v134, %v161
  %vm240 = vcmp.eq.s32.totalorder %v134, %v164
  %vm241 = vcmp.eq.s32.totalorder %v134, %v167
  %vm242 = vcmp.eq.s32.totalorder %v134, %v170
  %vm243 = vcmp.eq.s32.totalorder %v134, %v173
  %vm244 = vcmp.eq.s32.totalorder %v134, %v176
  %vm245 = vcmp.eq.s32.totalorder %v134, %v179
  %vm246 = vcmp.eq.s32.totalorder %v134, %v182
  %vm247 = vcmp.eq.s32.totalorder %v134, %v185
  %vm248 = vcmp.eq.s32.totalorder %v134, %v188
  %vm249 = vcmp.eq.s32.totalorder %v134, %v191
  %vm250 = vcmp.eq.s32.totalorder %v134, %v194
  %vm251 = vcmp.eq.s32.totalorder %v134, %v197
  %vm252 = vcmp.eq.s32.totalorder %v134, %v200
  %vm253 = vcmp.eq.s32.totalorder %v134, %v203
  %vm254 = vcmp.eq.s32.totalorder %v134, %v206
  %vm255 = vcmp.eq.s32.totalorder %v134, %v209
  %vm256 = vcmp.eq.s32.totalorder %v134, %v212
  %vm257 = vcmp.eq.s32.totalorder %v134, %v215
  %vm258 = vcmp.eq.s32.totalorder %v134, %v218
  %vm259 = vcmp.eq.s32.totalorder %v134, %v221
  %vm260 = vcmp.eq.s32.totalorder %v134, %v224
  %vm261 = vcmp.eq.s32.totalorder %v134, %v227
  %vm262 = vcmp.eq.s32.totalorder %v134, %v230
  %v263 = vsel %vm231, 1, 0
  %v264 = vsel %vm232, 1, 0
  %v265 = vsel %vm233, 1, 0
  %v266 = vsel %vm234, 1, 0
  %v267 = vsel %vm235, 1, 0
  %v268 = vsel %vm236, 1, 0
  %v269 = vsel %vm237, 1, 0
  %v270 = vsel %vm238, 1, 0
  %v271 = vsel %vm239, 1, 0
  %v272 = vsel %vm240, 1, 0
  %v273 = vsel %vm241, 1, 0
  %v274 = vsel %vm242, 1, 0
  %v275 = vsel %vm243, 1, 0
  %v276 = vsel %vm244, 1, 0
  %v277 = vsel %vm245, 1, 0
  %v278 = vsel %vm246, 1, 0
  %v279 = vsel %vm247, 1, 0
  %v280 = vsel %vm248, 1, 0
  %v281 = vsel %vm249, 1, 0
  %v282 = vsel %vm250, 1, 0
  %v283 = vsel %vm251, 1, 0
  %v284 = vsel %vm252, 1, 0
  %v285 = vsel %vm253, 1, 0
  %v286 = vsel %vm254, 1, 0
  %v287 = vsel %vm255, 1, 0
  %v288 = vsel %vm256, 1, 0
  %v289 = vsel %vm257, 1, 0
  %v290 = vsel %vm258, 1, 0
  %v291 = vsel %vm259, 1, 0
  %v292 = vsel %vm260, 1, 0
  %v293 = vsel %vm261, 1, 0
  %v294 = vsel %vm262, 1, 0
  %v295 = vcvt.s32.f32 %v263
  %v296 = vcvt.s32.f32 %v264
  %v297 = vcvt.s32.f32 %v265
  %v298 = vcvt.s32.f32 %v266
  %v299 = vcvt.s32.f32 %v267
  %v300 = vcvt.s32.f32 %v268
  %v301 = vcvt.s32.f32 %v269
  %v302 = vcvt.s32.f32 %v270
  %v303 = vcvt.s32.f32 %v271
  %v304 = vcvt.s32.f32 %v272
  %v305 = vcvt.s32.f32 %v273
  %v306 = vcvt.s32.f32 %v274
  %v307 = vcvt.s32.f32 %v275
  %v308 = vcvt.s32.f32 %v276
  %v309 = vcvt.s32.f32 %v277
  %v310 = vcvt.s32.f32 %v278
  %v311 = vcvt.s32.f32 %v279
  %v312 = vcvt.s32.f32 %v280
  %v313 = vcvt.s32.f32 %v281
  %v314 = vcvt.s32.f32 %v282
  %v315 = vcvt.s32.f32 %v283
  %v316 = vcvt.s32.f32 %v284
  %v317 = vcvt.s32.f32 %v285
  %v318 = vcvt.s32.f32 %v286
  %v319 = vcvt.s32.f32 %v287
  %v320 = vcvt.s32.f32 %v288
  %v321 = vcvt.s32.f32 %v289
  %v322 = vcvt.s32.f32 %v290
  %v323 = vcvt.s32.f32 %v291
  %v324 = vcvt.s32.f32 %v292
  %v325 = vcvt.s32.f32 %v293
  %v326 = vcvt.s32.f32 %v294
  %v327 = vpack.c.bf16 %v296, %v295
  %v328 = vpack.c.bf16 %v298, %v297
  %v329 = vpack.c.bf16 %v300, %v299
  %v330 = vpack.c.bf16 %v302, %v301
  %v331 = vpack.c.bf16 %v304, %v303
  %v332 = vpack.c.bf16 %v306, %v305
  %v333 = vpack.c.bf16 %v308, %v307
  %v334 = vpack.c.bf16 %v310, %v309
  %v335 = vpack.c.bf16 %v312, %v311
  %v336 = vpack.c.bf16 %v314, %v313
  %v337 = vpack.c.bf16 %v316, %v315
  %v338 = vpack.c.bf16 %v318, %v317
  %v339 = vpack.c.bf16 %v320, %v319
  %v340 = vpack.c.bf16 %v322, %v321
  %v341 = vpack.c.bf16 %v324, %v323
  %v342 = vpack.c.bf16 %v326, %v325
  %343 = vmatprep.subr.bf16.mxu0 0
  %344 = vmatpush1.bf16.msra.mxu0 %v327
  %345 = vmatprep.subr.bf16.mxu0 0
  %346 = vmatpush1.bf16.msra.mxu0 %v328
  %347 = vmatprep.subr.bf16.mxu0 0
  %348 = vmatpush1.bf16.msra.mxu0 %v329
  %349 = vmatprep.subr.bf16.mxu0 0
  %350 = vmatpush1.bf16.msra.mxu0 %v330
  %351 = vmatprep.subr.bf16.mxu0 0
  %352 = vmatpush1.bf16.msra.mxu0 %v331
  %353 = vmatprep.subr.bf16.mxu0 0
  %354 = vmatpush1.bf16.msra.mxu0 %v332
  %355 = vmatprep.subr.bf16.mxu0 0
  %356 = vmatpush1.bf16.msra.mxu0 %v333
  %357 = vmatprep.subr.bf16.mxu0 0
  %358 = vmatpush1.bf16.msra.mxu0 %v334
  %359 = vmatprep.subr.bf16.mxu0 0
  %360 = vmatpush1.bf16.msra.mxu0 %v335
  %361 = vmatprep.subr.bf16.mxu0 0
  %362 = vmatpush1.bf16.msra.mxu0 %v336
  %363 = vmatprep.subr.bf16.mxu0 0
  %364 = vmatpush1.bf16.msra.mxu0 %v337
  %365 = vmatprep.subr.bf16.mxu0 0
  %366 = vmatpush1.bf16.msra.mxu0 %v338
  %367 = vmatprep.subr.bf16.mxu0 0
  %368 = vmatpush1.bf16.msra.mxu0 %v339
  %369 = vmatprep.subr.bf16.mxu0 0
  %370 = vmatpush1.bf16.msra.mxu0 %v340
  %371 = vmatprep.subr.bf16.mxu0 0
  %372 = vmatpush1.bf16.msra.mxu0 %v341
  %373 = vmatprep.subr.bf16.mxu0 0
  %374 = vmatpush1.bf16.msra.mxu0 %v342
  %375 = vmatprep.mubr.bf16.mxu0 %v126
  %376 = vmatmul.mubr.bf16.gmra.mrb[0].mxu0 %v125
  %v377 = vpop.f32.mrb[0].mxu0
  %v378 = vadd.f32 0.0, %v377
  %v379 = vpop.f32.mrb[0].mxu0
  %v380 = vpop.f32.mrb[0].mxu0
  %v381 = vadd.f32 0.0, %v380
  %v382 = vpop.f32.mrb[0].mxu0
  %383 = vmatprep.mubr.bf16.mxu0 %v128
  %384 = vmatmul.mubr.bf16.gmra.mrb[0].mxu0 %v127
  %v385 = vpop.f32.mrb[0].mxu0
  %v386 = vadd.f32 0.0, %v385
  %v387 = vpop.f32.mrb[0].mxu0
  %v388 = vpop.f32.mrb[0].mxu0
  %v389 = vadd.f32 0.0, %v388
  %v390 = vpop.f32.mrb[0].mxu0
  %391 = vmatprep.mubr.bf16.mxu0 %v130
  %392 = vmatmul.mubr.bf16.gmra.mrb[0].mxu0 %v129
  %v393 = vpop.f32.mrb[0].mxu0
  %v394 = vadd.f32 0.0, %v393
  %v395 = vpop.f32.mrb[0].mxu0
  %v396 = vpop.f32.mrb[0].mxu0
  %v397 = vadd.f32 0.0, %v396
  %v398 = vpop.f32.mrb[0].mxu0
  %399 = vmatprep.mubr.bf16.mxu0 %v132
  %400 = vmatmul.mubr.bf16.gmra.mrb[0].mxu0 %v131
  %v401 = vpop.f32.mrb[0].mxu0
  %v402 = vadd.f32 0.0, %v401
  %v403 = vpop.f32.mrb[0].mxu0
  %v404 = vpop.f32.mrb[0].mxu0
  %v405 = vadd.f32 0.0, %v404
  %v406 = vpop.f32.mrb[0].mxu0
  %407 = vdwg.mxu0
  %vm408 = vcmask 523264
  %v409 = vsel %vm408, %v378, 0.0
  %410 = vadd.xlane.f32.xlu0 %v409
  %v411 = vpop.xlane.xlu0 %410
  %v412 = vsel %vm408, %v381, 0.0
  %413 = vadd.xlane.f32.xlu0 %v412
  %v414 = vpop.xlane.xlu0 %413
  %v415 = vsel %vm408, %v386, 0.0
  %416 = vadd.xlane.f32.xlu0 %v415
  %v417 = vpop.xlane.xlu0 %416
  %v418 = vsel %vm408, %v389, 0.0
  %419 = vadd.xlane.f32.xlu0 %v418
  %v420 = vpop.xlane.xlu0 %419
  %v421 = vsel %vm408, %v394, 0.0
  %422 = vadd.xlane.f32.xlu0 %v421
  %v423 = vpop.xlane.xlu0 %422
  %v424 = vsel %vm408, %v397, 0.0
  %425 = vadd.xlane.f32.xlu0 %v424
  %v426 = vpop.xlane.xlu0 %425
  %v427 = vsel %vm408, %v402, 0.0
  %428 = vadd.xlane.f32.xlu0 %v427
  %v429 = vpop.xlane.xlu0 %428
  %v430 = vsel %vm408, %v405, 0.0
  %431 = vadd.xlane.f32.xlu0 %v430
  %v432 = vpop.xlane.xlu0 %431
  %v433 = vmax.f32 %v411, 1.0
  %v434 = vmax.f32 %v414, 1.0
  %v435 = vmax.f32 %v417, 1.0
  %v436 = vmax.f32 %v420, 1.0
  %v437 = vmax.f32 %v423, 1.0
  %v438 = vmax.f32 %v426, 1.0
  %v439 = vmax.f32 %v429, 1.0
  %v440 = vmax.f32 %v432, 1.0
  %v441 = vrcp.pop %v433
  %v442 = vmul.f32 1.0, %v441
  %v443 = vrcp.pop %v434
  %v444 = vmul.f32 1.0, %v443
  %v445 = vrcp.pop %v435
  %v446 = vmul.f32 1.0, %v445
  %v447 = vrcp.pop %v436
  %v448 = vmul.f32 1.0, %v447
  %v449 = vrcp.pop %v437
  %v450 = vmul.f32 1.0, %v449
  %v451 = vrcp.pop %v438
  %v452 = vmul.f32 1.0, %v451
  %v453 = vrcp.pop %v439
  %v454 = vmul.f32 1.0, %v453
  %v455 = vrcp.pop %v440
  %v456 = vmul.f32 1.0, %v455
  %v457 = vpack.c.bf16 %v381, %v378
  %v458 = vpack.c.bf16 %v389, %v386
  %v459 = vpack.c.bf16 %v397, %v394
  %v460 = vpack.c.bf16 %v405, %v402
  %v461 = vld [vmem:[%s2] sm:$0xf]
  %v462 = vld [vmem:[%s2 + $0x4] sm:$0xf]
  %v463 = vld [vmem:[%s2 + $0x8] sm:$0xf]
  %v464 = vld [vmem:[%s2 + $0xc] sm:$0xf]
  %v465 = vld [vmem:[%s2 + $0x10] sm:$0xf]
  %v466 = vld [vmem:[%s2 + $0x14] sm:$0xf]
  %v467 = vld [vmem:[%s2 + $0x18] sm:$0xf]
  %v468 = vld [vmem:[%s2 + $0x1c] sm:$0xf]
  %v477 = vunpack.c.l.b16 %v461
  %v478 = vunpack.c.l.b16 %v462
  %v479 = vunpack.c.l.b16 %v463
  %v480 = vunpack.c.l.b16 %v464
  %v481 = vunpack.c.l.b16 %v465
  %v482 = vunpack.c.l.b16 %v466
  %v483 = vunpack.c.l.b16 %v467
  %v484 = vunpack.c.l.b16 %v468
  %v485 = vpack.c.b16 %v478, %v477
  %v486 = vpack.c.b16 %v480, %v479
  %v487 = vpack.c.b16 %v482, %v481
  %v488 = vpack.c.b16 %v484, %v483
  %v494 = vsel %vm408, %v457, 0
  %v497 = vsel %vm408, %v458, 0
  %v500 = vsel %vm408, %v459, 0
  %v503 = vsel %vm408, %v460, 0
  %505 = vmatprep.subr.bf16.mxu0 0
  %506 = vmatpush1.bf16.msra.mxu0 %v485
  %507 = vmatprep.subr.bf16.mxu0 0
  %508 = vmatpush1.bf16.msra.mxu0 %v486
  %509 = vmatprep.subr.bf16.mxu0 0
  %510 = vmatpush1.bf16.msra.mxu0 %v487
  %511 = vmatprep.subr.bf16.mxu0 0
  %512 = vmatpush1.bf16.msra.mxu0 %v488
  %513 = vmatprep.subr.bf16.mxu0 0
  %514 = vmatpush1.bf16.msra.mxu0 0
  %515 = vmatprep.subr.bf16.mxu0 0
  %516 = vmatpush1.bf16.msra.mxu0 0
  %517 = vmatprep.subr.bf16.mxu0 0
  %518 = vmatpush1.bf16.msra.mxu0 0
  %519 = vmatprep.subr.bf16.mxu0 0
  %520 = vmatpush1.bf16.msra.mxu0 0
  %521 = vmatprep.subr.bf16.mxu0 0
  %522 = vmatpush1.bf16.msra.mxu0 0
  %523 = vmatprep.subr.bf16.mxu0 0
  %524 = vmatpush1.bf16.msra.mxu0 0
  %525 = vmatprep.subr.bf16.mxu0 0
  %526 = vmatpush1.bf16.msra.mxu0 0
  %527 = vmatprep.subr.bf16.mxu0 0
  %528 = vmatpush1.bf16.msra.mxu0 0
  %529 = vmatprep.subr.bf16.mxu0 0
  %530 = vmatpush1.bf16.msra.mxu0 0
  %531 = vmatprep.subr.bf16.mxu0 0
  %532 = vmatpush1.bf16.msra.mxu0 0
  %533 = vmatprep.subr.bf16.mxu0 0
  %534 = vmatpush1.bf16.msra.mxu0 0
  %535 = vmatprep.subr.bf16.mxu0 0
  %536 = vmatpush1.bf16.msra.mxu0 0
  %537 = vmatprep.mubr.bf16.mxu0 0
  %538 = vmatmul.mubr.bf16.gmra.mrb[0].mxu0 %v494
  %v539 = vpop.f32.mrb[0].mxu0
  %v540 = vadd.f32 0.0, %v539
  %v541 = vpop.f32.mrb[0].mxu0
  %v542 = vpop.f32.mrb[0].mxu0
  %v543 = vadd.f32 0.0, %v542
  %v544 = vpop.f32.mrb[0].mxu0
  %545 = vmatprep.mubr.bf16.mxu0 0
  %546 = vmatmul.mubr.bf16.gmra.mrb[0].mxu0 %v497
  %v547 = vpop.f32.mrb[0].mxu0
  %v548 = vadd.f32 0.0, %v547
  %v549 = vpop.f32.mrb[0].mxu0
  %v550 = vpop.f32.mrb[0].mxu0
  %v551 = vadd.f32 0.0, %v550
  %v552 = vpop.f32.mrb[0].mxu0
  %553 = vmatprep.mubr.bf16.mxu0 0
  %554 = vmatmul.mubr.bf16.gmra.mrb[0].mxu0 %v500
  %v555 = vpop.f32.mrb[0].mxu0
  %v556 = vadd.f32 0.0, %v555
  %v557 = vpop.f32.mrb[0].mxu0
  %v558 = vpop.f32.mrb[0].mxu0
  %v559 = vadd.f32 0.0, %v558
  %v560 = vpop.f32.mrb[0].mxu0
  %561 = vmatprep.mubr.bf16.mxu0 0
  %562 = vmatmul.mubr.bf16.gmra.mrb[0].mxu0 %v503
  %v563 = vpop.f32.mrb[0].mxu0
  %v564 = vadd.f32 0.0, %v563
  %v565 = vpop.f32.mrb[0].mxu0
  %v566 = vpop.f32.mrb[0].mxu0
  %v567 = vadd.f32 0.0, %v566
  %v568 = vpop.f32.mrb[0].mxu0
  %569 = vdwg.mxu0
  %v570 = vmul.f32 %v540, %v442
  %v571 = vmul.f32 %v543, %v444
  %v572 = vmul.f32 %v548, %v446
  %v573 = vmul.f32 %v551, %v448
  %v574 = vmul.f32 %v556, %v450
  %v575 = vmul.f32 %v559, %v452
  %v576 = vmul.f32 %v564, %v454
  %v577 = vmul.f32 %v567, %v456
  %v578 = vpack.c.bf16 %v571, %v570
  %v579 = vpack.c.bf16 %v573, %v572
  %v580 = vpack.c.bf16 %v575, %v574
  %v581 = vpack.c.bf16 %v577, %v576
  %582 = vrot.lane.b32.xlu0 %v485, 32
  %v583 = vpop.permute.xlu0 %582
  %584 = vrot.lane.b32.xlu0 %v486, 32
  %v585 = vpop.permute.xlu0 %584
  %586 = vrot.lane.b32.xlu0 %v487, 32
  %v587 = vpop.permute.xlu0 %586
  %588 = vrot.lane.b32.xlu0 %v488, 32
  %v589 = vpop.permute.xlu0 %588
  %vm590 = vcmask 261120
  %v593 = vsel %vm590, %v578, %v583
  %v596 = vsel %vm590, %v579, %v585
  %v599 = vsel %vm590, %v580, %v587
  %v602 = vsel %vm590, %v581, %v589
  %v603 = vld [vmem:[%s3] sm:$0xf]
  %v604 = vld [vmem:[%s3 + $0x4] sm:$0xf]
  %v605 = vld [vmem:[%s3 + $0x8] sm:$0xf]
  %v606 = vld [vmem:[%s3 + $0xc] sm:$0xf]
  %v607 = vld [vmem:[%s3 + $0x10] sm:$0xf]
  %v608 = vld [vmem:[%s3 + $0x14] sm:$0xf]
  %v609 = vld [vmem:[%s3 + $0x18] sm:$0xf]
  %v610 = vld [vmem:[%s3 + $0x1c] sm:$0xf]
  %v611 = vld [vmem:[%s4] sm:$0x1]
  %v613 = vlaneseq
  %v614 = vshrl.u32 %v613, 7
  %v615 = vsub.s32 0, %v614
  %v616 = vrot.slane %v611, %v615
  %v626 = vunpack.c.l.b16 %v603
  %v627 = vunpack.c.l.b16 %v604
  %v628 = vunpack.c.l.b16 %v605
  %v629 = vunpack.c.l.b16 %v606
  %v630 = vunpack.c.l.b16 %v607
  %v631 = vunpack.c.l.b16 %v608
  %v632 = vunpack.c.l.b16 %v609
  %v633 = vunpack.c.l.b16 %v610
  %v634 = vpack.c.b16 %v627, %v626
  %v635 = vpack.c.b16 %v629, %v628
  %v636 = vpack.c.b16 %v631, %v630
  %v637 = vpack.c.b16 %v633, %v632
  %v642 = vsel %vm408, %v593, 0
  %v644 = vsel %vm408, %v596, 0
  %v646 = vsel %vm408, %v599, 0
  %v648 = vsel %vm408, %v602, 0
  %650 = vmatprep.subr.bf16.mxu0 0
  %651 = vmatpush1.bf16.msra.mxu0 %v634
  %652 = vmatprep.subr.bf16.mxu0 0
  %653 = vmatpush1.bf16.msra.mxu0 %v635
  %654 = vmatprep.subr.bf16.mxu0 0
  %655 = vmatpush1.bf16.msra.mxu0 %v636
  %656 = vmatprep.subr.bf16.mxu0 0
  %657 = vmatpush1.bf16.msra.mxu0 %v637
  %658 = vmatprep.subr.bf16.mxu0 0
  %659 = vmatpush1.bf16.msra.mxu0 0
  %660 = vmatprep.subr.bf16.mxu0 0
  %661 = vmatpush1.bf16.msra.mxu0 0
  %662 = vmatprep.subr.bf16.mxu0 0
  %663 = vmatpush1.bf16.msra.mxu0 0
  %664 = vmatprep.subr.bf16.mxu0 0
  %665 = vmatpush1.bf16.msra.mxu0 0
  %666 = vmatprep.subr.bf16.mxu0 0
  %667 = vmatpush1.bf16.msra.mxu0 0
  %668 = vmatprep.subr.bf16.mxu0 0
  %669 = vmatpush1.bf16.msra.mxu0 0
  %670 = vmatprep.subr.bf16.mxu0 0
  %671 = vmatpush1.bf16.msra.mxu0 0
  %672 = vmatprep.subr.bf16.mxu0 0
  %673 = vmatpush1.bf16.msra.mxu0 0
  %674 = vmatprep.subr.bf16.mxu0 0
  %675 = vmatpush1.bf16.msra.mxu0 0
  %676 = vmatprep.subr.bf16.mxu0 0
  %677 = vmatpush1.bf16.msra.mxu0 0
  %678 = vmatprep.subr.bf16.mxu0 0
  %679 = vmatpush1.bf16.msra.mxu0 0
  %680 = vmatprep.subr.bf16.mxu0 0
  %681 = vmatpush1.bf16.msra.mxu0 0
  %682 = vmatprep.mubr.bf16.mxu0 0
  %683 = vmatmul.mubr.bf16.gmra.mrb[0].mxu0 %v642
  %v684 = vpop.f32.mrb[0].mxu0
  %v685 = vadd.f32 %v616, %v684
  %v686 = vpop.f32.mrb[0].mxu0
  %v687 = vpop.f32.mrb[0].mxu0
  %v688 = vadd.f32 %v616, %v687
  %v689 = vpop.f32.mrb[0].mxu0
  %690 = vmatprep.mubr.bf16.mxu0 0
  %691 = vmatmul.mubr.bf16.gmra.mrb[0].mxu0 %v644
  %v692 = vpop.f32.mrb[0].mxu0
  %v693 = vadd.f32 %v616, %v692
  %v694 = vpop.f32.mrb[0].mxu0
  %v695 = vpop.f32.mrb[0].mxu0
  %v696 = vadd.f32 %v616, %v695
  %v697 = vpop.f32.mrb[0].mxu0
  %698 = vmatprep.mubr.bf16.mxu0 0
  %699 = vmatmul.mubr.bf16.gmra.mrb[0].mxu0 %v646
  %v700 = vpop.f32.mrb[0].mxu0
  %v701 = vadd.f32 %v616, %v700
  %v702 = vpop.f32.mrb[0].mxu0
  %v703 = vpop.f32.mrb[0].mxu0
  %v704 = vadd.f32 %v616, %v703
  %v705 = vpop.f32.mrb[0].mxu0
  %706 = vmatprep.mubr.bf16.mxu0 0
  %707 = vmatmul.mubr.bf16.gmra.mrb[0].mxu0 %v648
  %v708 = vpop.f32.mrb[0].mxu0
  %v709 = vadd.f32 %v616, %v708
  %v710 = vpop.f32.mrb[0].mxu0
  %v711 = vpop.f32.mrb[0].mxu0
  %v712 = vadd.f32 %v616, %v711
  %v713 = vpop.f32.mrb[0].mxu0
  %714 = vdwg.mxu0
  %v715 = vmax.f32 %v685, 0.0
  %v716 = vmax.f32 %v688, 0.0
  %v717 = vmax.f32 %v693, 0.0
  %v718 = vmax.f32 %v696, 0.0
  %v719 = vmax.f32 %v701, 0.0
  %v720 = vmax.f32 %v704, 0.0
  %v721 = vmax.f32 %v709, 0.0
  %v722 = vmax.f32 %v712, 0.0
  %v723 = vpack.c.bf16 %v716, %v715
  %v724 = vpack.c.bf16 %v718, %v717
  %v725 = vpack.c.bf16 %v720, %v719
  %v726 = vpack.c.bf16 %v722, %v721
  %727 = vmatprep.subr.bf16.mxu0 0
  %728 = vmatpush1.bf16.msra.mxu0 %v723
  %729 = vmatprep.subr.bf16.mxu0 0
  %730 = vmatpush1.bf16.msra.mxu0 %v724
  %731 = vmatprep.subr.bf16.mxu0 0
  %732 = vmatpush1.bf16.msra.mxu0 %v725
  %733 = vmatprep.subr.bf16.mxu0 0
  %734 = vmatpush1.bf16.msra.mxu0 %v726
  %735 = vmatprep.subr.bf16.mxu0 0
  %736 = vmatpush1.bf16.msra.mxu0 0
  %737 = vmatprep.subr.bf16.mxu0 0
  %738 = vmatpush1.bf16.msra.mxu0 0
  %739 = vmatprep.subr.bf16.mxu0 0
  %740 = vmatpush1.bf16.msra.mxu0 0
  %741 = vmatprep.subr.bf16.mxu0 0
  %742 = vmatpush1.bf16.msra.mxu0 0
  %743 = vmatprep.subr.bf16.mxu0 0
  %744 = vmatpush1.bf16.msra.mxu0 0
  %745 = vmatprep.subr.bf16.mxu0 0
  %746 = vmatpush1.bf16.msra.mxu0 0
  %747 = vmatprep.subr.bf16.mxu0 0
  %748 = vmatpush1.bf16.msra.mxu0 0
  %749 = vmatprep.subr.bf16.mxu0 0
  %750 = vmatpush1.bf16.msra.mxu0 0
  %751 = vmatprep.subr.bf16.mxu0 0
  %752 = vmatpush1.bf16.msra.mxu0 0
  %753 = vmatprep.subr.bf16.mxu0 0
  %754 = vmatpush1.bf16.msra.mxu0 0
  %755 = vmatprep.subr.bf16.mxu0 0
  %756 = vmatpush1.bf16.msra.mxu0 0
  %757 = vmatprep.subr.bf16.mxu0 0
  %758 = vmatpush1.bf16.msra.mxu0 0
  %759 = vmatprep.mubr.bf16.mxu0 0
  %760 = vmatmul.mubr.bf16.gmra.mrb[0].mxu0 %v494
  %v761 = vpop.f32.mrb[0].mxu0
  %v762 = vadd.f32 0.0, %v761
  %v763 = vpop.f32.mrb[0].mxu0
  %v764 = vpop.f32.mrb[0].mxu0
  %v765 = vadd.f32 0.0, %v764
  %v766 = vpop.f32.mrb[0].mxu0
  %767 = vmatprep.mubr.bf16.mxu0 0
  %768 = vmatmul.mubr.bf16.gmra.mrb[0].mxu0 %v497
  %v769 = vpop.f32.mrb[0].mxu0
  %v770 = vadd.f32 0.0, %v769
  %v771 = vpop.f32.mrb[0].mxu0
  %v772 = vpop.f32.mrb[0].mxu0
  %v773 = vadd.f32 0.0, %v772
  %v774 = vpop.f32.mrb[0].mxu0
  %775 = vmatprep.mubr.bf16.mxu0 0
  %776 = vmatmul.mubr.bf16.gmra.mrb[0].mxu0 %v500
  %v777 = vpop.f32.mrb[0].mxu0
  %v778 = vadd.f32 0.0, %v777
  %v779 = vpop.f32.mrb[0].mxu0
  %v780 = vpop.f32.mrb[0].mxu0
  %v781 = vadd.f32 0.0, %v780
  %v782 = vpop.f32.mrb[0].mxu0
  %783 = vmatprep.mubr.bf16.mxu0 0
  %784 = vmatmul.mubr.bf16.gmra.mrb[0].mxu0 %v503
  %v785 = vpop.f32.mrb[0].mxu0
  %v786 = vadd.f32 0.0, %v785
  %v787 = vpop.f32.mrb[0].mxu0
  %v788 = vpop.f32.mrb[0].mxu0
  %v789 = vadd.f32 0.0, %v788
  %v790 = vpop.f32.mrb[0].mxu0
  %791 = vdwg.mxu0
  %v792 = vmul.f32 %v762, %v442
  %v793 = vmul.f32 %v765, %v444
  %v794 = vmul.f32 %v770, %v446
  %v795 = vmul.f32 %v773, %v448
  %v796 = vmul.f32 %v778, %v450
  %v797 = vmul.f32 %v781, %v452
  %v798 = vmul.f32 %v786, %v454
  %v799 = vmul.f32 %v789, %v456
  %v800 = vpack.c.bf16 %v793, %v792
  %v801 = vpack.c.bf16 %v795, %v794
  %v802 = vpack.c.bf16 %v797, %v796
  %v803 = vpack.c.bf16 %v799, %v798
  %808 = vrot.lane.b32.xlu0 %v723, 32
  %v809 = vpop.permute.xlu0 %808
  %810 = vrot.lane.b32.xlu0 %v724, 32
  %v811 = vpop.permute.xlu0 %810
  %812 = vrot.lane.b32.xlu0 %v725, 32
  %v813 = vpop.permute.xlu0 %812
  %814 = vrot.lane.b32.xlu0 %v726, 32
  %v815 = vpop.permute.xlu0 %814
  %v818 = vsel %vm590, %v800, %v809
  %v821 = vsel %vm590, %v801, %v811
  %v824 = vsel %vm590, %v802, %v813
  %v827 = vsel %vm590, %v803, %v815
  %v828 = vld [vmem:[%s5] sm:$0xf]
  %v829 = vld [vmem:[%s5 + $0x4] sm:$0xf]
  %v830 = vld [vmem:[%s5 + $0x8] sm:$0xf]
  %v831 = vld [vmem:[%s5 + $0xc] sm:$0xf]
  %v832 = vld [vmem:[%s5 + $0x10] sm:$0xf]
  %v833 = vld [vmem:[%s5 + $0x14] sm:$0xf]
  %v834 = vld [vmem:[%s5 + $0x18] sm:$0xf]
  %v835 = vld [vmem:[%s5 + $0x1c] sm:$0xf]
  %v836 = vld [vmem:[%s6] sm:$0x1]
  %v838 = vlaneseq
  %v839 = vshrl.u32 %v838, 7
  %v840 = vsub.s32 0, %v839
  %v841 = vrot.slane %v836, %v840
  %v851 = vunpack.c.l.b16 %v828
  %v852 = vunpack.c.l.b16 %v829
  %v853 = vunpack.c.l.b16 %v830
  %v854 = vunpack.c.l.b16 %v831
  %v855 = vunpack.c.l.b16 %v832
  %v856 = vunpack.c.l.b16 %v833
  %v857 = vunpack.c.l.b16 %v834
  %v858 = vunpack.c.l.b16 %v835
  %v859 = vpack.c.b16 %v852, %v851
  %v860 = vpack.c.b16 %v854, %v853
  %v861 = vpack.c.b16 %v856, %v855
  %v862 = vpack.c.b16 %v858, %v857
  %v867 = vsel %vm408, %v818, 0
  %v869 = vsel %vm408, %v821, 0
  %v871 = vsel %vm408, %v824, 0
  %v873 = vsel %vm408, %v827, 0
  %875 = vmatprep.subr.bf16.mxu0 0
  %876 = vmatpush1.bf16.msra.mxu0 %v859
  %877 = vmatprep.subr.bf16.mxu0 0
  %878 = vmatpush1.bf16.msra.mxu0 %v860
  %879 = vmatprep.subr.bf16.mxu0 0
  %880 = vmatpush1.bf16.msra.mxu0 %v861
  %881 = vmatprep.subr.bf16.mxu0 0
  %882 = vmatpush1.bf16.msra.mxu0 %v862
  %883 = vmatprep.subr.bf16.mxu0 0
  %884 = vmatpush1.bf16.msra.mxu0 0
  %885 = vmatprep.subr.bf16.mxu0 0
  %886 = vmatpush1.bf16.msra.mxu0 0
  %887 = vmatprep.subr.bf16.mxu0 0
  %888 = vmatpush1.bf16.msra.mxu0 0
  %889 = vmatprep.subr.bf16.mxu0 0
  %890 = vmatpush1.bf16.msra.mxu0 0
  %891 = vmatprep.subr.bf16.mxu0 0
  %892 = vmatpush1.bf16.msra.mxu0 0
  %893 = vmatprep.subr.bf16.mxu0 0
  %894 = vmatpush1.bf16.msra.mxu0 0
  %895 = vmatprep.subr.bf16.mxu0 0
  %896 = vmatpush1.bf16.msra.mxu0 0
  %897 = vmatprep.subr.bf16.mxu0 0
  %898 = vmatpush1.bf16.msra.mxu0 0
  %899 = vmatprep.subr.bf16.mxu0 0
  %900 = vmatpush1.bf16.msra.mxu0 0
  %901 = vmatprep.subr.bf16.mxu0 0
  %902 = vmatpush1.bf16.msra.mxu0 0
  %903 = vmatprep.subr.bf16.mxu0 0
  %904 = vmatpush1.bf16.msra.mxu0 0
  %905 = vmatprep.subr.bf16.mxu0 0
  %906 = vmatpush1.bf16.msra.mxu0 0
  %907 = vmatprep.mubr.bf16.mxu0 0
  %908 = vmatmul.mubr.bf16.gmra.mrb[0].mxu0 %v867
  %v909 = vpop.f32.mrb[0].mxu0
  %v910 = vadd.f32 %v841, %v909
  %v911 = vpop.f32.mrb[0].mxu0
  %v912 = vpop.f32.mrb[0].mxu0
  %v913 = vadd.f32 %v841, %v912
  %v914 = vpop.f32.mrb[0].mxu0
  %915 = vmatprep.mubr.bf16.mxu0 0
  %916 = vmatmul.mubr.bf16.gmra.mrb[0].mxu0 %v869
  %v917 = vpop.f32.mrb[0].mxu0
  %v918 = vadd.f32 %v841, %v917
  %v919 = vpop.f32.mrb[0].mxu0
  %v920 = vpop.f32.mrb[0].mxu0
  %v921 = vadd.f32 %v841, %v920
  %v922 = vpop.f32.mrb[0].mxu0
  %923 = vmatprep.mubr.bf16.mxu0 0
  %924 = vmatmul.mubr.bf16.gmra.mrb[0].mxu0 %v871
  %v925 = vpop.f32.mrb[0].mxu0
  %v926 = vadd.f32 %v841, %v925
  %v927 = vpop.f32.mrb[0].mxu0
  %v928 = vpop.f32.mrb[0].mxu0
  %v929 = vadd.f32 %v841, %v928
  %v930 = vpop.f32.mrb[0].mxu0
  %931 = vmatprep.mubr.bf16.mxu0 0
  %932 = vmatmul.mubr.bf16.gmra.mrb[0].mxu0 %v873
  %v933 = vpop.f32.mrb[0].mxu0
  %v934 = vadd.f32 %v841, %v933
  %v935 = vpop.f32.mrb[0].mxu0
  %v936 = vpop.f32.mrb[0].mxu0
  %v937 = vadd.f32 %v841, %v936
  %v938 = vpop.f32.mrb[0].mxu0
  %939 = vdwg.mxu0
  %940 = vst.msk [vmem:[%s7] sm:$0xff] %vm590, %v910
  %941 = vst.msk [vmem:[%s7 + $0x8] sm:$0xff] %vm590, %v913
  %942 = vst.msk [vmem:[%s7 + $0x10] sm:$0xff] %vm590, %v918
  %943 = vst.msk [vmem:[%s7 + $0x18] sm:$0xff] %vm590, %v921
  %944 = vst.msk [vmem:[%s7 + $0x20] sm:$0xff] %vm590, %v926
  %945 = vst.msk [vmem:[%s7 + $0x28] sm:$0xff] %vm590, %v929
  %946 = vst.msk [vmem:[%s7 + $0x30] sm:$0xff] %vm590, %v934
  %947 = vst.msk [vmem:[%s7 + $0x38] sm:$0xff] %vm590, %v937
  // Predicated region
  $region30: #{tpu_custom_call.1} parent=0 // pred_check
    _
  $region31: #{tpu_custom_call.1} parent=0 // pred_check_branch
    %949 = sbr.rel (0) target = $region33
  $region32: #{tpu_custom_call.1} parent=0 // pred_region
    _
  $region33: #{tpu_custom_call.1} parent=0 // pred_fallthru
    _
  // Predicated region
  $region34: #{tpu_custom_call.1} parent=0 // pred_check
    _
  $region35: #{tpu_custom_call.1} parent=0 // pred_check_branch
    %951 = sbr.rel (0) target = $region37
  $region36: #{tpu_custom_call.1} parent=0 // pred_region
    _
  $region37: #{tpu_custom_call.1} parent=0 // pred_fallthru
    _

</llo_original>
